<compile_context>
chip_gen: v7x
topology: tpu7x:2x2x1
jax: 0.10.0
libtpu: 0.0.40
codegen_flags: <defaults>
</compile_context>

<pallas_src>
import functools

import jax
import jax.numpy as jnp
import numpy as np
from jax import lax
from jax.experimental import pallas as pl
from jax.experimental.pallas import tpu as pltpu

SUBLANE = 8
LANE = 128


def _round_up(x, m):
    return ((x + m - 1) // m) * m


def seqgen_kernel(tok_ref, w_ref, b_ref, y_ref, *, seq_len, batch_p, vocab_rows,
                  embed, hidden, fc_hidden, out_p):
    """Whole forward pass in one gridless kernel invocation.

    tok_ref : (T*Bp, 1) int32  time-major tokens, batch padded to a sublane multiple
    w_ref   : (R, E+2H+FC+Op)  packed [emb | Wx | Wh | W1 | W2_pad]  (rows zero-padded)
    b_ref   : (1, H+FC+Op)     packed [bx+bh | b1 | b2_pad]
    y_ref   : (T*Bp, Op)       lane-dense logits (Op multiple of 128)
    """
    f32 = jnp.float32
    n = seq_len * batch_p

    # ---- fused embedding gather: one-hot @ table on the MXU (no HBM emb slab) ----
    tok = tok_ref[...]                                                   # (N, 1) int32
    onehot = (tok == lax.broadcasted_iota(jnp.int32, (n, vocab_rows), 1)).astype(f32)
    emb_tab = w_ref[:, 0:embed]                                          # (R, E)
    x = jnp.dot(onehot, emb_tab, preferred_element_type=f32)             # (N, E)

    # ---- hoisted, batched input projection (bias bx+bh folded in wrapper) ----
    c0 = embed
    wx = w_ref[0:embed, c0:c0 + hidden]                                  # (E, H)
    xwx = jnp.dot(x, wx, preferred_element_type=f32) + b_ref[:, 0:hidden]  # (N, H)

    # ---- serial recurrence: only tanh(xwx_t + h @ Wh) stays on the critical path ----
    c1 = c0 + hidden
    wh = w_ref[0:hidden, c1:c1 + hidden]                                 # (H, H)
    h = jnp.full((batch_p, hidden), -1.0, f32)       # h_0 = -ones, broadcast over batch
    hs = []
    # seq_len is a small static int -> fully unrolled; every per-step slice is
    # sublane-tile aligned because batch_p is a multiple of 8; hidden states stay in
    # vregs (no VMEM scratch round trip).
    # TODO(synk): for large T switch to lax.fori_loop + a VMEM scratch with
    # pl.ds/pl.multiple_of aligned 8-row stores to bound vreg live ranges.
    for t in range(seq_len):
        h = jnp.tanh(xwx[t * batch_p:(t + 1) * batch_p, :]
                     + jnp.dot(h, wh, preferred_element_type=f32))
        hs.append(h)
    h_all = jnp.concatenate(hs, axis=0)                                  # (N, H)

    # ---- batched FC head over all T*Bp rows, single lane-dense slab store ----
    c2 = c1 + hidden
    w1 = w_ref[0:hidden, c2:c2 + fc_hidden]                              # (H, FC)
    z = jnp.tanh(jnp.dot(h_all, w1, preferred_element_type=f32)
                 + b_ref[:, hidden:hidden + fc_hidden])
    c3 = c2 + fc_hidden
    w2 = w_ref[0:fc_hidden, c3:c3 + out_p]                               # (FC, Op)
    y_ref[...] = (jnp.dot(z, w2, preferred_element_type=f32)
                  + b_ref[:, hidden + fc_hidden:hidden + fc_hidden + out_p])


def sequence_generator_forward(tokens, params):
    """tokens: (B, T) int32.  Returns logits (B, T, O), matching the PyTorch module."""
    B, T = tokens.shape
    V, E = params["embedding"].shape
    H = params["wh"].shape[0]
    FC = params["w1"].shape[1]
    O = params["w2"].shape[1]

    Bp = _round_up(max(B, SUBLANE), SUBLANE)   # batch padded -> sublane-aligned slabs
    Op = _round_up(O, LANE)                    # out dim padded -> lane-dense store
    R = _round_up(max(V, E, H, FC), SUBLANE)   # packed weight-slab row count

    # Tokens: pad batch (token 0 = valid index, rows discarded later), time-major flatten.
    tok_p = jnp.pad(tokens.astype(jnp.int32), ((0, Bp - B), (0, 0)))     # (Bp, T)
    tok_tm = jnp.transpose(tok_p, (1, 0)).reshape(T * Bp, 1)             # (T*Bp, 1)

    # Pack embedding + all weights into one VMEM slab (one DMA instead of five).
    def pad_rows(m):
        return jnp.pad(m, ((0, R - m.shape[0]), (0, 0)))

    w2_p = jnp.pad(params["w2"], ((0, 0), (0, Op - O)))                  # (FC, Op)
    w_packed = jnp.concatenate(
        [pad_rows(params["embedding"]), pad_rows(params["wx"]), pad_rows(params["wh"]),
         pad_rows(params["w1"]), pad_rows(w2_p)], axis=1)                # (R, E+2H+FC+Op)

    # Pack biases (bx+bh folded) into one slab.
    b2_p = jnp.pad(params["b2"], ((0, 0), (0, Op - O)))                  # (1, Op)
    b_packed = jnp.concatenate(
        [params["bx"] + params["bh"], params["b1"], b2_p], axis=1)       # (1, H+FC+Op)

    kernel = functools.partial(
        seqgen_kernel, seq_len=T, batch_p=Bp, vocab_rows=R,
        embed=E, hidden=H, fc_hidden=FC, out_p=Op)

    # TODO(synk): at production sizes, cast the non-serial matmuls (xwx, FC head) to
    # bf16 inputs (f32 accumulate) and tile the head over a grid axis for v7x VMEM/2-TC.
    vmem = pl.BlockSpec(memory_space=pltpu.MemorySpace.VMEM)
    y_flat = pl.pallas_call(
        kernel,
        out_shape=jax.ShapeDtypeStruct((T * Bp, Op), jnp.float32),
        in_specs=[vmem, vmem, vmem],
        out_specs=vmem,
        compiler_params=pltpu.CompilerParams(vmem_limit_bytes=16 * 1024 * 1024),
    )(tok_tm, w_packed, b_packed)

    # Un-pad and return batch-major, like the PyTorch module.
    y = y_flat.reshape(T, Bp, Op)[:, :B, :O]                             # (T, B, O)
    return jnp.transpose(y, (1, 0, 2))                                   # (B, T, O)


def reference_forward(tokens, params):
    """Pure-JAX reference reproducing the PyTorch forward pass."""
    x = params["embedding"][tokens]                      # (B, T, E)
    x = jnp.transpose(x, (1, 0, 2))                      # (T, B, E)
    B = x.shape[1]
    H = params["wh"].shape[0]
    h = -jnp.ones((B, H), jnp.float32)

    def step(h, x_t):
        h = jnp.tanh(x_t @ params["wx"] + params["bx"]
                     + h @ params["wh"] + params["bh"])
        z = jnp.tanh(h @ params["w1"] + params["b1"])
        y = z @ params["w2"] + params["b2"]
        return h, y

    _, ys = jax.lax.scan(step, h, x)                     # (T, B, O)
    return jnp.transpose(ys, (1, 0, 2))                  # (B, T, O)


def init_params(key, in_dim, embed_dim, hidden_dim, fc_hidden, out_dim):
    ks = jax.random.split(key, 9)

    def lin(k, fan_in, shape):
        bound = 1.0 / np.sqrt(fan_in)
        return jax.random.uniform(k, shape, jnp.float32, -bound, bound)

    return {
        "embedding": jax.random.normal(ks[0], (in_dim, embed_dim), jnp.float32),
        "wx": lin(ks[1], embed_dim, (embed_dim, hidden_dim)),
        "bx": lin(ks[2], embed_dim, (1, hidden_dim)),
        "wh": lin(ks[3], hidden_dim, (hidden_dim, hidden_dim)),
        "bh": lin(ks[4], hidden_dim, (1, hidden_dim)),
        "w1": lin(ks[5], hidden_dim, (hidden_dim, fc_hidden)),
        "b1": lin(ks[6], hidden_dim, (1, fc_hidden)),
        "w2": lin(ks[7], fc_hidden, (fc_hidden, out_dim)),
        "b2": lin(ks[8], fc_hidden, (1, out_dim)),
    }


if __name__ == "__main__":
    # Small shapes consistent with the module: vocab=16, embed=32, hidden=32,
    # fc_layers=[32], out=16 (outDim == inDim for a token generator), B=2, T=8.
    IN_DIM, EMBED_DIM, HIDDEN_DIM, FC_HIDDEN, OUT_DIM = 16, 32, 32, 32, 16
    B, T = 2, 8

    key = jax.random.PRNGKey(0)
    k_params, k_tokens = jax.random.split(key)
    params = init_params(k_params, IN_DIM, EMBED_DIM, HIDDEN_DIM, FC_HIDDEN, OUT_DIM)
    tokens = jax.random.randint(k_tokens, (B, T), 0, IN_DIM, dtype=jnp.int32)

    out = sequence_generator_forward(tokens, params)
    out = jax.block_until_ready(out)

    ref = jax.block_until_ready(reference_forward(tokens, params))
    np.testing.assert_allclose(np.asarray(out), np.asarray(ref), rtol=1e-5, atol=1e-5)
    assert out.shape == (B, T, OUT_DIM)

    # TODO(synk): the autoregressive `generate` path (multinomial sampling loop)
    # is host-side control flow and is not implemented as a kernel.
    print("KERNEL_OK")
</pallas_src>

<mosaic_0001>
module attributes {stable_mosaic.version = 11 : i64} {
  func.func @seqgen_kernel(%arg0: memref<64x1xi32, #tpu.memory_space<vmem>>, %arg1: memref<32x256xf32, #tpu.memory_space<vmem>>, %arg2: memref<1x192xf32, #tpu.memory_space<vmem>>, %arg3: memref<64x128xf32, #tpu.memory_space<vmem>>) attributes {dimension_semantics = [], scalar_prefetch = 0 : i64, scratch_operands = 0 : i64, tpu.core_type = #tpu.core_type<tc>} {
    %c0 = arith.constant 0 : index
    %c0_0 = arith.constant 0 : index
    %0 = vector.load %arg0[%c0, %c0_0] : memref<64x1xi32, #tpu.memory_space<vmem>>, vector<64x1xi32>
    %1 = tpu.iota {dimensions = array<i32: 1>} : vector<64x32xi32>
    %2 = vector.broadcast %0 : vector<64x1xi32> to vector<64x32xi32>
    %3 = arith.cmpi eq, %2, %1 : vector<64x32xi32>
    %4 = arith.extui %3 : vector<64x32xi1> to vector<64x32xi32>
    %5 = arith.sitofp %4 : vector<64x32xi32> to vector<64x32xf32>
    %c0_1 = arith.constant 0 : index
    %c0_2 = arith.constant 0 : index
    %6 = vector.load %arg1[%c0_1, %c0_2] : memref<32x256xf32, #tpu.memory_space<vmem>>, vector<32x32xf32>
    %cst = arith.constant dense<0.000000e+00> : vector<64x32xf32>
    %7 = tpu.matmul %5, %6, %cst {dimension_numbers = #tpu.dot_dimension_numbers<[1], [0], [0], [1], [0, 0, 1, 1], [], []>} : vector<64x32xf32>, vector<32x32xf32>, vector<64x32xf32> -> vector<64x32xf32>
    %c0_3 = arith.constant 0 : index
    %c32 = arith.constant 32 : index
    %8 = vector.load %arg1[%c0_3, %c32] : memref<32x256xf32, #tpu.memory_space<vmem>>, vector<32x32xf32>
    %cst_4 = arith.constant dense<0.000000e+00> : vector<64x32xf32>
    %9 = tpu.matmul %7, %8, %cst_4 {dimension_numbers = #tpu.dot_dimension_numbers<[1], [0], [0], [1], [0, 0, 1, 1], [], []>} : vector<64x32xf32>, vector<32x32xf32>, vector<64x32xf32> -> vector<64x32xf32>
    %c0_5 = arith.constant 0 : index
    %c0_6 = arith.constant 0 : index
    %10 = vector.load %arg2[%c0_5, %c0_6] : memref<1x192xf32, #tpu.memory_space<vmem>>, vector<1x32xf32>
    %11 = vector.broadcast %10 : vector<1x32xf32> to vector<64x32xf32>
    %12 = arith.addf %9, %11 : vector<64x32xf32>
    %c0_7 = arith.constant 0 : index
    %c64 = arith.constant 64 : index
    %13 = vector.load %arg1[%c0_7, %c64] : memref<32x256xf32, #tpu.memory_space<vmem>>, vector<32x32xf32>
    %cst_8 = arith.constant -1.000000e+00 : f32
    %14 = vector.broadcast %cst_8 : f32 to vector<8x32xf32>
    %15 = vector.extract_strided_slice %12 {offsets = [0, 0], sizes = [8, 32], strides = [1, 1]} : vector<64x32xf32> to vector<8x32xf32>
    %cst_9 = arith.constant dense<0.000000e+00> : vector<8x32xf32>
    %16 = tpu.matmul %14, %13, %cst_9 {dimension_numbers = #tpu.dot_dimension_numbers<[1], [0], [0], [1], [0, 0, 1, 1], [], []>} : vector<8x32xf32>, vector<32x32xf32>, vector<8x32xf32> -> vector<8x32xf32>
    %17 = arith.addf %15, %16 : vector<8x32xf32>
    %18 = math.tanh %17 : vector<8x32xf32>
    %19 = vector.extract_strided_slice %12 {offsets = [8, 0], sizes = [8, 32], strides = [1, 1]} : vector<64x32xf32> to vector<8x32xf32>
    %cst_10 = arith.constant dense<0.000000e+00> : vector<8x32xf32>
    %20 = tpu.matmul %18, %13, %cst_10 {dimension_numbers = #tpu.dot_dimension_numbers<[1], [0], [0], [1], [0, 0, 1, 1], [], []>} : vector<8x32xf32>, vector<32x32xf32>, vector<8x32xf32> -> vector<8x32xf32>
    %21 = arith.addf %19, %20 : vector<8x32xf32>
    %22 = math.tanh %21 : vector<8x32xf32>
    %23 = vector.extract_strided_slice %12 {offsets = [16, 0], sizes = [8, 32], strides = [1, 1]} : vector<64x32xf32> to vector<8x32xf32>
    %cst_11 = arith.constant dense<0.000000e+00> : vector<8x32xf32>
    %24 = tpu.matmul %22, %13, %cst_11 {dimension_numbers = #tpu.dot_dimension_numbers<[1], [0], [0], [1], [0, 0, 1, 1], [], []>} : vector<8x32xf32>, vector<32x32xf32>, vector<8x32xf32> -> vector<8x32xf32>
    %25 = arith.addf %23, %24 : vector<8x32xf32>
    %26 = math.tanh %25 : vector<8x32xf32>
    %27 = vector.extract_strided_slice %12 {offsets = [24, 0], sizes = [8, 32], strides = [1, 1]} : vector<64x32xf32> to vector<8x32xf32>
    %cst_12 = arith.constant dense<0.000000e+00> : vector<8x32xf32>
    %28 = tpu.matmul %26, %13, %cst_12 {dimension_numbers = #tpu.dot_dimension_numbers<[1], [0], [0], [1], [0, 0, 1, 1], [], []>} : vector<8x32xf32>, vector<32x32xf32>, vector<8x32xf32> -> vector<8x32xf32>
    %29 = arith.addf %27, %28 : vector<8x32xf32>
    %30 = math.tanh %29 : vector<8x32xf32>
    %31 = vector.extract_strided_slice %12 {offsets = [32, 0], sizes = [8, 32], strides = [1, 1]} : vector<64x32xf32> to vector<8x32xf32>
    %cst_13 = arith.constant dense<0.000000e+00> : vector<8x32xf32>
    %32 = tpu.matmul %30, %13, %cst_13 {dimension_numbers = #tpu.dot_dimension_numbers<[1], [0], [0], [1], [0, 0, 1, 1], [], []>} : vector<8x32xf32>, vector<32x32xf32>, vector<8x32xf32> -> vector<8x32xf32>
    %33 = arith.addf %31, %32 : vector<8x32xf32>
    %34 = math.tanh %33 : vector<8x32xf32>
    %35 = vector.extract_strided_slice %12 {offsets = [40, 0], sizes = [8, 32], strides = [1, 1]} : vector<64x32xf32> to vector<8x32xf32>
    %cst_14 = arith.constant dense<0.000000e+00> : vector<8x32xf32>
    %36 = tpu.matmul %34, %13, %cst_14 {dimension_numbers = #tpu.dot_dimension_numbers<[1], [0], [0], [1], [0, 0, 1, 1], [], []>} : vector<8x32xf32>, vector<32x32xf32>, vector<8x32xf32> -> vector<8x32xf32>
    %37 = arith.addf %35, %36 : vector<8x32xf32>
    %38 = math.tanh %37 : vector<8x32xf32>
    %39 = vector.extract_strided_slice %12 {offsets = [48, 0], sizes = [8, 32], strides = [1, 1]} : vector<64x32xf32> to vector<8x32xf32>
    %cst_15 = arith.constant dense<0.000000e+00> : vector<8x32xf32>
    %40 = tpu.matmul %38, %13, %cst_15 {dimension_numbers = #tpu.dot_dimension_numbers<[1], [0], [0], [1], [0, 0, 1, 1], [], []>} : vector<8x32xf32>, vector<32x32xf32>, vector<8x32xf32> -> vector<8x32xf32>
    %41 = arith.addf %39, %40 : vector<8x32xf32>
    %42 = math.tanh %41 : vector<8x32xf32>
    %43 = vector.extract_strided_slice %12 {offsets = [56, 0], sizes = [8, 32], strides = [1, 1]} : vector<64x32xf32> to vector<8x32xf32>
    %cst_16 = arith.constant dense<0.000000e+00> : vector<8x32xf32>
    %44 = tpu.matmul %42, %13, %cst_16 {dimension_numbers = #tpu.dot_dimension_numbers<[1], [0], [0], [1], [0, 0, 1, 1], [], []>} : vector<8x32xf32>, vector<32x32xf32>, vector<8x32xf32> -> vector<8x32xf32>
    %45 = arith.addf %43, %44 : vector<8x32xf32>
    %46 = math.tanh %45 : vector<8x32xf32>
    %47 = tpu.concatenate %18, %22, %26, %30, %34, %38, %42, %46 in 0 : vector<8x32xf32>, vector<8x32xf32>, vector<8x32xf32>, vector<8x32xf32>, vector<8x32xf32>, vector<8x32xf32>, vector<8x32xf32>, vector<8x32xf32> -> vector<64x32xf32>
    %c0_17 = arith.constant 0 : index
    %c96 = arith.constant 96 : index
    %48 = vector.load %arg1[%c0_17, %c96] : memref<32x256xf32, #tpu.memory_space<vmem>>, vector<32x32xf32>
    %cst_18 = arith.constant dense<0.000000e+00> : vector<64x32xf32>
    %49 = tpu.matmul %47, %48, %cst_18 {dimension_numbers = #tpu.dot_dimension_numbers<[1], [0], [0], [1], [0, 0, 1, 1], [], []>} : vector<64x32xf32>, vector<32x32xf32>, vector<64x32xf32> -> vector<64x32xf32>
    %c0_19 = arith.constant 0 : index
    %c32_20 = arith.constant 32 : index
    %50 = vector.load %arg2[%c0_19, %c32_20] : memref<1x192xf32, #tpu.memory_space<vmem>>, vector<1x32xf32>
    %51 = vector.broadcast %50 : vector<1x32xf32> to vector<64x32xf32>
    %52 = arith.addf %49, %51 : vector<64x32xf32>
    %53 = math.tanh %52 : vector<64x32xf32>
    %c0_21 = arith.constant 0 : index
    %c128 = arith.constant 128 : index
    %54 = vector.load %arg1[%c0_21, %c128] : memref<32x256xf32, #tpu.memory_space<vmem>>, vector<32x128xf32>
    %cst_22 = arith.constant dense<0.000000e+00> : vector<64x128xf32>
    %55 = tpu.matmul %53, %54, %cst_22 {dimension_numbers = #tpu.dot_dimension_numbers<[1], [0], [0], [1], [0, 0, 1, 1], [], []>} : vector<64x32xf32>, vector<32x128xf32>, vector<64x128xf32> -> vector<64x128xf32>
    %c0_23 = arith.constant 0 : index
    %c64_24 = arith.constant 64 : index
    %56 = vector.load %arg2[%c0_23, %c64_24] : memref<1x192xf32, #tpu.memory_space<vmem>>, vector<1x128xf32>
    %57 = vector.broadcast %56 : vector<1x128xf32> to vector<64x128xf32>
    %58 = arith.addf %55, %57 : vector<64x128xf32>
    %c0_25 = arith.constant 0 : index
    %c0_26 = arith.constant 0 : index
    %59 = vector.load %arg3[%c0_25, %c0_26] : memref<64x128xf32, #tpu.memory_space<vmem>>, vector<64x128xf32>
    tpu.vector_store %arg3[%c0_25, %c0_26], %58 {strides = array<i32>} : memref<64x128xf32, #tpu.memory_space<vmem>>, vector<64x128xf32>,
    return
  }
}

</mosaic_0001>

<llo_original>
// kernel: tpu_custom_call.1
$region0: #{tpu_custom_call.1}
  #allocation0 [shape = 'u32[]', space=smem, size = 0x4, offset = 0x4, fixed_abs, tag = 'smem constant byte address 0x4 - core index']
  #allocation1 [shape = 'u32[144,128]{1,0:T(1,128)}', space=vmem, size = 0x12000, scoped, tag = 'internal scratch']
  %s0 = inlined_call_operand.vmem [shape: s32[64,1], index: 0, kind: input, shape index: {}]
  %s1 = inlined_call_operand.vmem [shape: f32[32,256], index: 1, kind: input, shape index: {}]
  %s2 = inlined_call_operand.vmem [shape: f32[1,192], index: 2, kind: input, shape index: {}]
  %s3 = inlined_call_operand.hbm [shape: f32[64,128], index: 3, kind: output, shape index: {}]
  %s4 = sld [smem:[#allocation0]]
  $region22: #{tpu_custom_call.1} parent=0
    _
  %s6 = ssub.s32 1, %s4
  %s7 = scalar_select 0, %s6, %s4
  $region1: #{tpu_custom_call.1} parent=0
    #allocation2 [shape = 'u8[32768]{0}', space=vmem, size = 0x8000, scoped, tag = 'output window, operand 0, single buffered']
    #allocation3 [shape = 's32[1]{0}', space=sflag, size = 0x4, scoped, tag = 'scoped memory for tpu_custom_call.1']
    %8 = vsyncpa [#allocation3], 0
    // Predicated region
    $region2: #{tpu_custom_call.1} parent=1 // pred_check
      _
    $region3: #{tpu_custom_call.1} parent=1 // pred_check_branch
      %10 = sbr.rel (0) target = $region5
    $region4: #{tpu_custom_call.1} parent=1 // pred_region
      _
    $region5: #{tpu_custom_call.1} parent=1 // pred_fallthru
      _
    // Predicated region
    $region6: #{tpu_custom_call.1} parent=1 // pred_check
      _
    $region7: #{tpu_custom_call.1} parent=1 // pred_check_branch
      %12 = sbr.rel (0) target = $region9
    $region8: #{tpu_custom_call.1} parent=1 // pred_region
      _
    $region9: #{tpu_custom_call.1} parent=1 // pred_fallthru
      _
    // Predicated region
    $region10: #{tpu_custom_call.1} parent=1 // pred_check
      _
    $region11: #{tpu_custom_call.1} parent=1 // pred_check_branch
      %14 = sbr.rel (0) target = $region13
    $region12: #{tpu_custom_call.1} parent=1 // pred_region
      _
    $region13: #{tpu_custom_call.1} parent=1 // pred_fallthru
      _
    %v15 = vld [vmem:[%s0] sm:$0xff]
    %v16 = vld [vmem:[%s0 + $0x8] sm:$0xff]
    %v17 = vld [vmem:[%s0 + $0x10] sm:$0xff]
    %v18 = vld [vmem:[%s0 + $0x18] sm:$0xff]
    %v19 = vld [vmem:[%s0 + $0x20] sm:$0xff]
    %v20 = vld [vmem:[%s0 + $0x28] sm:$0xff]
    %v21 = vld [vmem:[%s0 + $0x30] sm:$0xff]
    %v22 = vld [vmem:[%s0 + $0x38] sm:$0xff]
    %v23 = vlaneseq
    %v24 = vand.u32 %v23, 127
    %25 = vset.pattern.permute.xlu0 0
    %26 = vperm.xlu0 %25, %v15
    %v27 = vpop.permute.xlu0 %26
    %28 = vset.pattern.permute.xlu0 0
    %29 = vperm.xlu0 %28, %v16
    %v30 = vpop.permute.xlu0 %29
    %31 = vset.pattern.permute.xlu0 0
    %32 = vperm.xlu0 %31, %v17
    %v33 = vpop.permute.xlu0 %32
    %34 = vset.pattern.permute.xlu0 0
    %35 = vperm.xlu0 %34, %v18
    %v36 = vpop.permute.xlu0 %35
    %37 = vset.pattern.permute.xlu0 0
    %38 = vperm.xlu0 %37, %v19
    %v39 = vpop.permute.xlu0 %38
    %40 = vset.pattern.permute.xlu0 0
    %41 = vperm.xlu0 %40, %v20
    %v42 = vpop.permute.xlu0 %41
    %43 = vset.pattern.permute.xlu0 0
    %44 = vperm.xlu0 %43, %v21
    %v45 = vpop.permute.xlu0 %44
    %46 = vset.pattern.permute.xlu0 0
    %47 = vperm.xlu0 %46, %v22
    %v48 = vpop.permute.xlu0 %47
    %vm49 = vcmp.eq.s32.totalorder %v27, %v24
    %vm50 = vcmp.eq.s32.totalorder %v30, %v24
    %vm51 = vcmp.eq.s32.totalorder %v33, %v24
    %vm52 = vcmp.eq.s32.totalorder %v36, %v24
    %vm53 = vcmp.eq.s32.totalorder %v39, %v24
    %vm54 = vcmp.eq.s32.totalorder %v42, %v24
    %vm55 = vcmp.eq.s32.totalorder %v45, %v24
    %vm56 = vcmp.eq.s32.totalorder %v48, %v24
    %v57 = vsel %vm49, 1, 0
    %v58 = vsel %vm50, 1, 0
    %v59 = vsel %vm51, 1, 0
    %v60 = vsel %vm52, 1, 0
    %v61 = vsel %vm53, 1, 0
    %v62 = vsel %vm54, 1, 0
    %v63 = vsel %vm55, 1, 0
    %v64 = vsel %vm56, 1, 0
    %v65 = vcvt.s32.f32 %v57
    %v66 = vcvt.s32.f32 %v58
    %v67 = vcvt.s32.f32 %v59
    %v68 = vcvt.s32.f32 %v60
    %v69 = vcvt.s32.f32 %v61
    %v70 = vcvt.s32.f32 %v62
    %v71 = vcvt.s32.f32 %v63
    %v72 = vcvt.s32.f32 %v64
    %v73 = vld [vmem:[%s1] sm:$0xff]
    %v74 = vld [vmem:[%s1 + $0x10] sm:$0xff]
    %v75 = vld [vmem:[%s1 + $0x20] sm:$0xff]
    %v76 = vld [vmem:[%s1 + $0x30] sm:$0xff]
    %vm77 = vcmask 261120
    %v79 = vsel %vm77, %v65, 0
    %v82 = vsel %vm77, %v66, 0
    %v85 = vsel %vm77, %v67, 0
    %v88 = vsel %vm77, %v68, 0
    %v91 = vsel %vm77, %v69, 0
    %v94 = vsel %vm77, %v70, 0
    %v97 = vsel %vm77, %v71, 0
    %v100 = vsel %vm77, %v72, 0
    %102 = vmatprep.subr.mxu0 0.0
    %103 = vmatpush1.msra.mxu0 %v73
    %104 = vmatprep.subr.mxu0 0.0
    %105 = vmatpush1.msra.mxu0 %v74
    %106 = vmatprep.subr.mxu0 0.0
    %107 = vmatpush1.msra.mxu0 %v75
    %108 = vmatprep.subr.mxu0 0.0
    %109 = vmatpush1.msra.mxu0 %v76
    %110 = vmatprep.subr.mxu0 0.0
    %111 = vmatpush1.msra.mxu0 0.0
    %112 = vmatprep.subr.mxu0 0.0
    %113 = vmatpush1.msra.mxu0 0.0
    %114 = vmatprep.subr.mxu0 0.0
    %115 = vmatpush1.msra.mxu0 0.0
    %116 = vmatprep.subr.mxu0 0.0
    %117 = vmatpush1.msra.mxu0 0.0
    %118 = vmatprep.subr.mxu0 0.0
    %119 = vmatpush1.msra.mxu0 0.0
    %120 = vmatprep.subr.mxu0 0.0
    %121 = vmatpush1.msra.mxu0 0.0
    %122 = vmatprep.subr.mxu0 0.0
    %123 = vmatpush1.msra.mxu0 0.0
    %124 = vmatprep.subr.mxu0 0.0
    %125 = vmatpush1.msra.mxu0 0.0
    %126 = vmatprep.subr.mxu0 0.0
    %127 = vmatpush1.msra.mxu0 0.0
    %128 = vmatprep.subr.mxu0 0.0
    %129 = vmatpush1.msra.mxu0 0.0
    %130 = vmatprep.subr.mxu0 0.0
    %131 = vmatpush1.msra.mxu0 0.0
    %132 = vmatprep.subr.mxu0 0.0
    %133 = vmatpush1.msra.mxu0 0.0
    %134 = vmatprep.subr.mxu0 0.0
    %135 = vmatpush1.msra.mxu0 0.0
    %136 = vmatprep.subr.mxu0 0.0
    %137 = vmatpush1.msra.mxu0 0.0
    %138 = vmatprep.subr.mxu0 0.0
    %139 = vmatpush1.msra.mxu0 0.0
    %140 = vmatprep.subr.mxu0 0.0
    %141 = vmatpush1.msra.mxu0 0.0
    %142 = vmatprep.subr.mxu0 0.0
    %143 = vmatpush1.msra.mxu0 0.0
    %144 = vmatprep.subr.mxu0 0.0
    %145 = vmatpush1.msra.mxu0 0.0
    %146 = vmatprep.subr.mxu0 0.0
    %147 = vmatpush1.msra.mxu0 0.0
    %148 = vmatprep.subr.mxu0 0.0
    %149 = vmatpush1.msra.mxu0 0.0
    %150 = vmatprep.subr.mxu0 0.0
    %151 = vmatpush1.msra.mxu0 0.0
    %152 = vmatprep.subr.mxu0 0.0
    %153 = vmatpush1.msra.mxu0 0.0
    %154 = vmatprep.subr.mxu0 0.0
    %155 = vmatpush1.msra.mxu0 0.0
    %156 = vmatprep.subr.mxu0 0.0
    %157 = vmatpush1.msra.mxu0 0.0
    %158 = vmatprep.subr.mxu0 0.0
    %159 = vmatpush1.msra.mxu0 0.0
    %160 = vmatprep.subr.mxu0 0.0
    %161 = vmatpush1.msra.mxu0 0.0
    %162 = vmatprep.subr.mxu0 0.0
    %163 = vmatpush1.msra.mxu0 0.0
    %164 = vmatprep.subr.mxu0 0.0
    %165 = vmatpush1.msra.mxu0 0.0
    %166 = vmatprep.mubr.f32.mxu0 0.0
    %167 = vmatmul.mubr.f32.gmra.mrb[0].mxu0 %v79
    %v168 = vpop.f32.mrb[0].mxu0
    %v169 = vadd.f32 0.0, %v168
    %v170 = vpop.f32.mrb[0].mxu0
    %171 = vmatprep.mubr.f32.mxu0 0.0
    %172 = vmatmul.mubr.f32.gmra.mrb[0].mxu0 %v82
    %v173 = vpop.f32.mrb[0].mxu0
    %v174 = vadd.f32 0.0, %v173
    %v175 = vpop.f32.mrb[0].mxu0
    %176 = vmatprep.mubr.f32.mxu0 0.0
    %177 = vmatmul.mubr.f32.gmra.mrb[0].mxu0 %v85
    %v178 = vpop.f32.mrb[0].mxu0
    %v179 = vadd.f32 0.0, %v178
    %v180 = vpop.f32.mrb[0].mxu0
    %181 = vmatprep.mubr.f32.mxu0 0.0
    %182 = vmatmul.mubr.f32.gmra.mrb[0].mxu0 %v88
    %v183 = vpop.f32.mrb[0].mxu0
    %v184 = vadd.f32 0.0, %v183
    %v185 = vpop.f32.mrb[0].mxu0
    %186 = vmatprep.mubr.f32.mxu0 0.0
    %187 = vmatmul.mubr.f32.gmra.mrb[0].mxu0 %v91
    %v188 = vpop.f32.mrb[0].mxu0
    %v189 = vadd.f32 0.0, %v188
    %v190 = vpop.f32.mrb[0].mxu0
    %191 = vmatprep.mubr.f32.mxu0 0.0
    %192 = vmatmul.mubr.f32.gmra.mrb[0].mxu0 %v94
    %v193 = vpop.f32.mrb[0].mxu0
    %v194 = vadd.f32 0.0, %v193
    %v195 = vpop.f32.mrb[0].mxu0
    %196 = vmatprep.mubr.f32.mxu0 0.0
    %197 = vmatmul.mubr.f32.gmra.mrb[0].mxu0 %v97
    %v198 = vpop.f32.mrb[0].mxu0
    %v199 = vadd.f32 0.0, %v198
    %v200 = vpop.f32.mrb[0].mxu0
    %201 = vmatprep.mubr.f32.mxu0 0.0
    %202 = vmatmul.mubr.f32.gmra.mrb[0].mxu0 %v100
    %v203 = vpop.f32.mrb[0].mxu0
    %v204 = vadd.f32 0.0, %v203
    %v205 = vpop.f32.mrb[0].mxu0
    %206 = vdwg.mxu0
    %v207 = vld [vmem:[%s2] sm:$0x1]
    %v209 = vlaneseq
    %v210 = vshrl.u32 %v209, 7
    %v211 = vsub.s32 0, %v210
    %v212 = vrot.slane %v207, %v211
    %218 = vrot.lane.b32.xlu0 %v73, 96
    %v219 = vpop.permute.xlu0 %218
    %220 = vrot.lane.b32.xlu0 %v74, 96
    %v221 = vpop.permute.xlu0 %220
    %222 = vrot.lane.b32.xlu0 %v75, 96
    %v223 = vpop.permute.xlu0 %222
    %224 = vrot.lane.b32.xlu0 %v76, 96
    %v225 = vpop.permute.xlu0 %224
    %v231 = vsel %vm77, %v169, 0
    %v234 = vsel %vm77, %v174, 0
    %v237 = vsel %vm77, %v179, 0
    %v240 = vsel %vm77, %v184, 0
    %v243 = vsel %vm77, %v189, 0
    %v246 = vsel %vm77, %v194, 0
    %v249 = vsel %vm77, %v199, 0
    %v252 = vsel %vm77, %v204, 0
    %254 = vmatprep.subr.mxu0 0.0
    %255 = vmatpush1.msra.mxu0 %v219
    %256 = vmatprep.subr.mxu0 0.0
    %257 = vmatpush1.msra.mxu0 %v221
    %258 = vmatprep.subr.mxu0 0.0
    %259 = vmatpush1.msra.mxu0 %v223
    %260 = vmatprep.subr.mxu0 0.0
    %261 = vmatpush1.msra.mxu0 %v225
    %262 = vmatprep.subr.mxu0 0.0
    %263 = vmatpush1.msra.mxu0 0.0
    %264 = vmatprep.subr.mxu0 0.0
    %265 = vmatpush1.msra.mxu0 0.0
    %266 = vmatprep.subr.mxu0 0.0
    %267 = vmatpush1.msra.mxu0 0.0
    %268 = vmatprep.subr.mxu0 0.0
    %269 = vmatpush1.msra.mxu0 0.0
    %270 = vmatprep.subr.mxu0 0.0
    %271 = vmatpush1.msra.mxu0 0.0
    %272 = vmatprep.subr.mxu0 0.0
    %273 = vmatpush1.msra.mxu0 0.0
    %274 = vmatprep.subr.mxu0 0.0
    %275 = vmatpush1.msra.mxu0 0.0
    %276 = vmatprep.subr.mxu0 0.0
    %277 = vmatpush1.msra.mxu0 0.0
    %278 = vmatprep.subr.mxu0 0.0
    %279 = vmatpush1.msra.mxu0 0.0
    %280 = vmatprep.subr.mxu0 0.0
    %281 = vmatpush1.msra.mxu0 0.0
    %282 = vmatprep.subr.mxu0 0.0
    %283 = vmatpush1.msra.mxu0 0.0
    %284 = vmatprep.subr.mxu0 0.0
    %285 = vmatpush1.msra.mxu0 0.0
    %286 = vmatprep.subr.mxu0 0.0
    %287 = vmatpush1.msra.mxu0 0.0
    %288 = vmatprep.subr.mxu0 0.0
    %289 = vmatpush1.msra.mxu0 0.0
    %290 = vmatprep.subr.mxu0 0.0
    %291 = vmatpush1.msra.mxu0 0.0
    %292 = vmatprep.subr.mxu0 0.0
    %293 = vmatpush1.msra.mxu0 0.0
    %294 = vmatprep.subr.mxu0 0.0
    %295 = vmatpush1.msra.mxu0 0.0
    %296 = vmatprep.subr.mxu0 0.0
    %297 = vmatpush1.msra.mxu0 0.0
    %298 = vmatprep.subr.mxu0 0.0
    %299 = vmatpush1.msra.mxu0 0.0
    %300 = vmatprep.subr.mxu0 0.0
    %301 = vmatpush1.msra.mxu0 0.0
    %302 = vmatprep.subr.mxu0 0.0
    %303 = vmatpush1.msra.mxu0 0.0
    %304 = vmatprep.subr.mxu0 0.0
    %305 = vmatpush1.msra.mxu0 0.0
    %306 = vmatprep.subr.mxu0 0.0
    %307 = vmatpush1.msra.mxu0 0.0
    %308 = vmatprep.subr.mxu0 0.0
    %309 = vmatpush1.msra.mxu0 0.0
    %310 = vmatprep.subr.mxu0 0.0
    %311 = vmatpush1.msra.mxu0 0.0
    %312 = vmatprep.subr.mxu0 0.0
    %313 = vmatpush1.msra.mxu0 0.0
    %314 = vmatprep.subr.mxu0 0.0
    %315 = vmatpush1.msra.mxu0 0.0
    %316 = vmatprep.subr.mxu0 0.0
    %317 = vmatpush1.msra.mxu0 0.0
    %318 = vmatprep.mubr.f32.mxu0 0.0
    %319 = vmatmul.mubr.f32.gmra.mrb[0].mxu0 %v231
    %v320 = vpop.f32.mrb[0].mxu0
    %v321 = vadd.f32 %v212, %v320
    %v322 = vpop.f32.mrb[0].mxu0
    %323 = vmatprep.mubr.f32.mxu0 0.0
    %324 = vmatmul.mubr.f32.gmra.mrb[0].mxu0 %v234
    %v325 = vpop.f32.mrb[0].mxu0
    %v326 = vadd.f32 %v212, %v325
    %v327 = vpop.f32.mrb[0].mxu0
    %328 = vmatprep.mubr.f32.mxu0 0.0
    %329 = vmatmul.mubr.f32.gmra.mrb[0].mxu0 %v237
    %v330 = vpop.f32.mrb[0].mxu0
    %v331 = vadd.f32 %v212, %v330
    %v332 = vpop.f32.mrb[0].mxu0
    %333 = vmatprep.mubr.f32.mxu0 0.0
    %334 = vmatmul.mubr.f32.gmra.mrb[0].mxu0 %v240
    %v335 = vpop.f32.mrb[0].mxu0
    %v336 = vadd.f32 %v212, %v335
    %v337 = vpop.f32.mrb[0].mxu0
    %338 = vmatprep.mubr.f32.mxu0 0.0
    %339 = vmatmul.mubr.f32.gmra.mrb[0].mxu0 %v243
    %v340 = vpop.f32.mrb[0].mxu0
    %v341 = vadd.f32 %v212, %v340
    %v342 = vpop.f32.mrb[0].mxu0
    %343 = vmatprep.mubr.f32.mxu0 0.0
    %344 = vmatmul.mubr.f32.gmra.mrb[0].mxu0 %v246
    %v345 = vpop.f32.mrb[0].mxu0
    %v346 = vadd.f32 %v212, %v345
    %v347 = vpop.f32.mrb[0].mxu0
    %348 = vmatprep.mubr.f32.mxu0 0.0
    %349 = vmatmul.mubr.f32.gmra.mrb[0].mxu0 %v249
    %v350 = vpop.f32.mrb[0].mxu0
    %v351 = vadd.f32 %v212, %v350
    %v352 = vpop.f32.mrb[0].mxu0
    %353 = vmatprep.mubr.f32.mxu0 0.0
    %354 = vmatmul.mubr.f32.gmra.mrb[0].mxu0 %v252
    %v355 = vpop.f32.mrb[0].mxu0
    %v356 = vadd.f32 %v212, %v355
    %v357 = vpop.f32.mrb[0].mxu0
    %358 = vdwg.mxu0
    %359 = vrot.lane.b32.xlu0 %v73, 64
    %v360 = vpop.permute.xlu0 %359
    %361 = vrot.lane.b32.xlu0 %v74, 64
    %v362 = vpop.permute.xlu0 %361
    %363 = vrot.lane.b32.xlu0 %v75, 64
    %v364 = vpop.permute.xlu0 %363
    %365 = vrot.lane.b32.xlu0 %v76, 64
    %v366 = vpop.permute.xlu0 %365
    %v372 = vsel %vm77, -1.0, 0
    %374 = vmatprep.subr.mxu0 0.0
    %375 = vmatpush1.msra.mxu0 %v360
    %376 = vmatprep.subr.mxu0 0.0
    %377 = vmatpush1.msra.mxu0 %v362
    %378 = vmatprep.subr.mxu0 0.0
    %379 = vmatpush1.msra.mxu0 %v364
    %380 = vmatprep.subr.mxu0 0.0
    %381 = vmatpush1.msra.mxu0 %v366
    %382 = vmatprep.subr.mxu0 0.0
    %383 = vmatpush1.msra.mxu0 0.0
    %384 = vmatprep.subr.mxu0 0.0
    %385 = vmatpush1.msra.mxu0 0.0
    %386 = vmatprep.subr.mxu0 0.0
    %387 = vmatpush1.msra.mxu0 0.0
    %388 = vmatprep.subr.mxu0 0.0
    %389 = vmatpush1.msra.mxu0 0.0
    %390 = vmatprep.subr.mxu0 0.0
    %391 = vmatpush1.msra.mxu0 0.0
    %392 = vmatprep.subr.mxu0 0.0
    %393 = vmatpush1.msra.mxu0 0.0
    %394 = vmatprep.subr.mxu0 0.0
    %395 = vmatpush1.msra.mxu0 0.0
    %396 = vmatprep.subr.mxu0 0.0
    %397 = vmatpush1.msra.mxu0 0.0
    %398 = vmatprep.subr.mxu0 0.0
    %399 = vmatpush1.msra.mxu0 0.0
    %400 = vmatprep.subr.mxu0 0.0
    %401 = vmatpush1.msra.mxu0 0.0
    %402 = vmatprep.subr.mxu0 0.0
    %403 = vmatpush1.msra.mxu0 0.0
    %404 = vmatprep.subr.mxu0 0.0
    %405 = vmatpush1.msra.mxu0 0.0
    %406 = vmatprep.subr.mxu0 0.0
    %407 = vmatpush1.msra.mxu0 0.0
    %408 = vmatprep.subr.mxu0 0.0
    %409 = vmatpush1.msra.mxu0 0.0
    %410 = vmatprep.subr.mxu0 0.0
    %411 = vmatpush1.msra.mxu0 0.0
    %412 = vmatprep.subr.mxu0 0.0
    %413 = vmatpush1.msra.mxu0 0.0
    %414 = vmatprep.subr.mxu0 0.0
    %415 = vmatpush1.msra.mxu0 0.0
    %416 = vmatprep.subr.mxu0 0.0
    %417 = vmatpush1.msra.mxu0 0.0
    %418 = vmatprep.subr.mxu0 0.0
    %419 = vmatpush1.msra.mxu0 0.0
    %420 = vmatprep.subr.mxu0 0.0
    %421 = vmatpush1.msra.mxu0 0.0
    %422 = vmatprep.subr.mxu0 0.0
    %423 = vmatpush1.msra.mxu0 0.0
    %424 = vmatprep.subr.mxu0 0.0
    %425 = vmatpush1.msra.mxu0 0.0
    %426 = vmatprep.subr.mxu0 0.0
    %427 = vmatpush1.msra.mxu0 0.0
    %428 = vmatprep.subr.mxu0 0.0
    %429 = vmatpush1.msra.mxu0 0.0
    %430 = vmatprep.subr.mxu0 0.0
    %431 = vmatpush1.msra.mxu0 0.0
    %432 = vmatprep.subr.mxu0 0.0
    %433 = vmatpush1.msra.mxu0 0.0
    %434 = vmatprep.subr.mxu0 0.0
    %435 = vmatpush1.msra.mxu0 0.0
    %436 = vmatprep.subr.mxu0 0.0
    %437 = vmatpush1.msra.mxu0 0.0
    %438 = vmatprep.mubr.f32.mxu0 0.0
    %439 = vmatmul.mubr.f32.gmra.mrb[0].mxu0 %v372
    %v440 = vpop.f32.mrb[0].mxu0
    %v441 = vadd.f32 0.0, %v440
    %v442 = vpop.f32.mrb[0].mxu0
    %443 = vdwg.mxu0
    %v444 = vadd.f32 %v321, %v441
    %v445 = vtanh.pop %v444
    %v447 = vsel %vm77, %v445, 0
    %449 = vmatprep.subr.mxu0 0.0
    %450 = vmatpush1.msra.mxu0 %v360
    %451 = vmatprep.subr.mxu0 0.0
    %452 = vmatpush1.msra.mxu0 %v362
    %453 = vmatprep.subr.mxu0 0.0
    %454 = vmatpush1.msra.mxu0 %v364
    %455 = vmatprep.subr.mxu0 0.0
    %456 = vmatpush1.msra.mxu0 %v366
    %457 = vmatprep.subr.mxu0 0.0
    %458 = vmatpush1.msra.mxu0 0.0
    %459 = vmatprep.subr.mxu0 0.0
    %460 = vmatpush1.msra.mxu0 0.0
    %461 = vmatprep.subr.mxu0 0.0
    %462 = vmatpush1.msra.mxu0 0.0
    %463 = vmatprep.subr.mxu0 0.0
    %464 = vmatpush1.msra.mxu0 0.0
    %465 = vmatprep.subr.mxu0 0.0
    %466 = vmatpush1.msra.mxu0 0.0
    %467 = vmatprep.subr.mxu0 0.0
    %468 = vmatpush1.msra.mxu0 0.0
    %469 = vmatprep.subr.mxu0 0.0
    %470 = vmatpush1.msra.mxu0 0.0
    %471 = vmatprep.subr.mxu0 0.0
    %472 = vmatpush1.msra.mxu0 0.0
    %473 = vmatprep.subr.mxu0 0.0
    %474 = vmatpush1.msra.mxu0 0.0
    %475 = vmatprep.subr.mxu0 0.0
    %476 = vmatpush1.msra.mxu0 0.0
    %477 = vmatprep.subr.mxu0 0.0
    %478 = vmatpush1.msra.mxu0 0.0
    %479 = vmatprep.subr.mxu0 0.0
    %480 = vmatpush1.msra.mxu0 0.0
    %481 = vmatprep.subr.mxu0 0.0
    %482 = vmatpush1.msra.mxu0 0.0
    %483 = vmatprep.subr.mxu0 0.0
    %484 = vmatpush1.msra.mxu0 0.0
    %485 = vmatprep.subr.mxu0 0.0
    %486 = vmatpush1.msra.mxu0 0.0
    %487 = vmatprep.subr.mxu0 0.0
    %488 = vmatpush1.msra.mxu0 0.0
    %489 = vmatprep.subr.mxu0 0.0
    %490 = vmatpush1.msra.mxu0 0.0
    %491 = vmatprep.subr.mxu0 0.0
    %492 = vmatpush1.msra.mxu0 0.0
    %493 = vmatprep.subr.mxu0 0.0
    %494 = vmatpush1.msra.mxu0 0.0
    %495 = vmatprep.subr.mxu0 0.0
    %496 = vmatpush1.msra.mxu0 0.0
    %497 = vmatprep.subr.mxu0 0.0
    %498 = vmatpush1.msra.mxu0 0.0
    %499 = vmatprep.subr.mxu0 0.0
    %500 = vmatpush1.msra.mxu0 0.0
    %501 = vmatprep.subr.mxu0 0.0
    %502 = vmatpush1.msra.mxu0 0.0
    %503 = vmatprep.subr.mxu0 0.0
    %504 = vmatpush1.msra.mxu0 0.0
    %505 = vmatprep.subr.mxu0 0.0
    %506 = vmatpush1.msra.mxu0 0.0
    %507 = vmatprep.subr.mxu0 0.0
    %508 = vmatpush1.msra.mxu0 0.0
    %509 = vmatprep.subr.mxu0 0.0
    %510 = vmatpush1.msra.mxu0 0.0
    %511 = vmatprep.subr.mxu0 0.0
    %512 = vmatpush1.msra.mxu0 0.0
    %513 = vmatprep.mubr.f32.mxu0 0.0
    %514 = vmatmul.mubr.f32.gmra.mrb[0].mxu0 %v447
    %v515 = vpop.f32.mrb[0].mxu0
    %v516 = vadd.f32 0.0, %v515
    %v517 = vpop.f32.mrb[0].mxu0
    %518 = vdwg.mxu0
    %v519 = vadd.f32 %v326, %v516
    %v520 = vtanh.pop %v519
    %v522 = vsel %vm77, %v520, 0
    %524 = vmatprep.subr.mxu0 0.0
    %525 = vmatpush1.msra.mxu0 %v360
    %526 = vmatprep.subr.mxu0 0.0
    %527 = vmatpush1.msra.mxu0 %v362
    %528 = vmatprep.subr.mxu0 0.0
    %529 = vmatpush1.msra.mxu0 %v364
    %530 = vmatprep.subr.mxu0 0.0
    %531 = vmatpush1.msra.mxu0 %v366
    %532 = vmatprep.subr.mxu0 0.0
    %533 = vmatpush1.msra.mxu0 0.0
    %534 = vmatprep.subr.mxu0 0.0
    %535 = vmatpush1.msra.mxu0 0.0
    %536 = vmatprep.subr.mxu0 0.0
    %537 = vmatpush1.msra.mxu0 0.0
    %538 = vmatprep.subr.mxu0 0.0
    %539 = vmatpush1.msra.mxu0 0.0
    %540 = vmatprep.subr.mxu0 0.0
    %541 = vmatpush1.msra.mxu0 0.0
    %542 = vmatprep.subr.mxu0 0.0
    %543 = vmatpush1.msra.mxu0 0.0
    %544 = vmatprep.subr.mxu0 0.0
    %545 = vmatpush1.msra.mxu0 0.0
    %546 = vmatprep.subr.mxu0 0.0
    %547 = vmatpush1.msra.mxu0 0.0
    %548 = vmatprep.subr.mxu0 0.0
    %549 = vmatpush1.msra.mxu0 0.0
    %550 = vmatprep.subr.mxu0 0.0
    %551 = vmatpush1.msra.mxu0 0.0
    %552 = vmatprep.subr.mxu0 0.0
    %553 = vmatpush1.msra.mxu0 0.0
    %554 = vmatprep.subr.mxu0 0.0
    %555 = vmatpush1.msra.mxu0 0.0
    %556 = vmatprep.subr.mxu0 0.0
    %557 = vmatpush1.msra.mxu0 0.0
    %558 = vmatprep.subr.mxu0 0.0
    %559 = vmatpush1.msra.mxu0 0.0
    %560 = vmatprep.subr.mxu0 0.0
    %561 = vmatpush1.msra.mxu0 0.0
    %562 = vmatprep.subr.mxu0 0.0
    %563 = vmatpush1.msra.mxu0 0.0
    %564 = vmatprep.subr.mxu0 0.0
    %565 = vmatpush1.msra.mxu0 0.0
    %566 = vmatprep.subr.mxu0 0.0
    %567 = vmatpush1.msra.mxu0 0.0
    %568 = vmatprep.subr.mxu0 0.0
    %569 = vmatpush1.msra.mxu0 0.0
    %570 = vmatprep.subr.mxu0 0.0
    %571 = vmatpush1.msra.mxu0 0.0
    %572 = vmatprep.subr.mxu0 0.0
    %573 = vmatpush1.msra.mxu0 0.0
    %574 = vmatprep.subr.mxu0 0.0
    %575 = vmatpush1.msra.mxu0 0.0
    %576 = vmatprep.subr.mxu0 0.0
    %577 = vmatpush1.msra.mxu0 0.0
    %578 = vmatprep.subr.mxu0 0.0
    %579 = vmatpush1.msra.mxu0 0.0
    %580 = vmatprep.subr.mxu0 0.0
    %581 = vmatpush1.msra.mxu0 0.0
    %582 = vmatprep.subr.mxu0 0.0
    %583 = vmatpush1.msra.mxu0 0.0
    %584 = vmatprep.subr.mxu0 0.0
    %585 = vmatpush1.msra.mxu0 0.0
    %586 = vmatprep.subr.mxu0 0.0
    %587 = vmatpush1.msra.mxu0 0.0
    %588 = vmatprep.mubr.f32.mxu0 0.0
    %589 = vmatmul.mubr.f32.gmra.mrb[0].mxu0 %v522
    %v590 = vpop.f32.mrb[0].mxu0
    %v591 = vadd.f32 0.0, %v590
    %v592 = vpop.f32.mrb[0].mxu0
    %593 = vdwg.mxu0
    %v594 = vadd.f32 %v331, %v591
    %v595 = vtanh.pop %v594
    %v597 = vsel %vm77, %v595, 0
    %599 = vmatprep.subr.mxu0 0.0
    %600 = vmatpush1.msra.mxu0 %v360
    %601 = vmatprep.subr.mxu0 0.0
    %602 = vmatpush1.msra.mxu0 %v362
    %603 = vmatprep.subr.mxu0 0.0
    %604 = vmatpush1.msra.mxu0 %v364
    %605 = vmatprep.subr.mxu0 0.0
    %606 = vmatpush1.msra.mxu0 %v366
    %607 = vmatprep.subr.mxu0 0.0
    %608 = vmatpush1.msra.mxu0 0.0
    %609 = vmatprep.subr.mxu0 0.0
    %610 = vmatpush1.msra.mxu0 0.0
    %611 = vmatprep.subr.mxu0 0.0
    %612 = vmatpush1.msra.mxu0 0.0
    %613 = vmatprep.subr.mxu0 0.0
    %614 = vmatpush1.msra.mxu0 0.0
    %615 = vmatprep.subr.mxu0 0.0
    %616 = vmatpush1.msra.mxu0 0.0
    %617 = vmatprep.subr.mxu0 0.0
    %618 = vmatpush1.msra.mxu0 0.0
    %619 = vmatprep.subr.mxu0 0.0
    %620 = vmatpush1.msra.mxu0 0.0
    %621 = vmatprep.subr.mxu0 0.0
    %622 = vmatpush1.msra.mxu0 0.0
    %623 = vmatprep.subr.mxu0 0.0
    %624 = vmatpush1.msra.mxu0 0.0
    %625 = vmatprep.subr.mxu0 0.0
    %626 = vmatpush1.msra.mxu0 0.0
    %627 = vmatprep.subr.mxu0 0.0
    %628 = vmatpush1.msra.mxu0 0.0
    %629 = vmatprep.subr.mxu0 0.0
    %630 = vmatpush1.msra.mxu0 0.0
    %631 = vmatprep.subr.mxu0 0.0
    %632 = vmatpush1.msra.mxu0 0.0
    %633 = vmatprep.subr.mxu0 0.0
    %634 = vmatpush1.msra.mxu0 0.0
    %635 = vmatprep.subr.mxu0 0.0
    %636 = vmatpush1.msra.mxu0 0.0
    %637 = vmatprep.subr.mxu0 0.0
    %638 = vmatpush1.msra.mxu0 0.0
    %639 = vmatprep.subr.mxu0 0.0
    %640 = vmatpush1.msra.mxu0 0.0
    %641 = vmatprep.subr.mxu0 0.0
    %642 = vmatpush1.msra.mxu0 0.0
    %643 = vmatprep.subr.mxu0 0.0
    %644 = vmatpush1.msra.mxu0 0.0
    %645 = vmatprep.subr.mxu0 0.0
    %646 = vmatpush1.msra.mxu0 0.0
    %647 = vmatprep.subr.mxu0 0.0
    %648 = vmatpush1.msra.mxu0 0.0
    %649 = vmatprep.subr.mxu0 0.0
    %650 = vmatpush1.msra.mxu0 0.0
    %651 = vmatprep.subr.mxu0 0.0
    %652 = vmatpush1.msra.mxu0 0.0
    %653 = vmatprep.subr.mxu0 0.0
    %654 = vmatpush1.msra.mxu0 0.0
    %655 = vmatprep.subr.mxu0 0.0
    %656 = vmatpush1.msra.mxu0 0.0
    %657 = vmatprep.subr.mxu0 0.0
    %658 = vmatpush1.msra.mxu0 0.0
    %659 = vmatprep.subr.mxu0 0.0
    %660 = vmatpush1.msra.mxu0 0.0
    %661 = vmatprep.subr.mxu0 0.0
    %662 = vmatpush1.msra.mxu0 0.0
    %663 = vmatprep.mubr.f32.mxu0 0.0
    %664 = vmatmul.mubr.f32.gmra.mrb[0].mxu0 %v597
    %v665 = vpop.f32.mrb[0].mxu0
    %v666 = vadd.f32 0.0, %v665
    %v667 = vpop.f32.mrb[0].mxu0
    %668 = vdwg.mxu0
    %v669 = vadd.f32 %v336, %v666
    %v670 = vtanh.pop %v669
    %v672 = vsel %vm77, %v670, 0
    %674 = vmatprep.subr.mxu0 0.0
    %675 = vmatpush1.msra.mxu0 %v360
    %676 = vmatprep.subr.mxu0 0.0
    %677 = vmatpush1.msra.mxu0 %v362
    %678 = vmatprep.subr.mxu0 0.0
    %679 = vmatpush1.msra.mxu0 %v364
    %680 = vmatprep.subr.mxu0 0.0
    %681 = vmatpush1.msra.mxu0 %v366
    %682 = vmatprep.subr.mxu0 0.0
    %683 = vmatpush1.msra.mxu0 0.0
    %684 = vmatprep.subr.mxu0 0.0
    %685 = vmatpush1.msra.mxu0 0.0
    %686 = vmatprep.subr.mxu0 0.0
    %687 = vmatpush1.msra.mxu0 0.0
    %688 = vmatprep.subr.mxu0 0.0
    %689 = vmatpush1.msra.mxu0 0.0
    %690 = vmatprep.subr.mxu0 0.0
    %691 = vmatpush1.msra.mxu0 0.0
    %692 = vmatprep.subr.mxu0 0.0
    %693 = vmatpush1.msra.mxu0 0.0
    %694 = vmatprep.subr.mxu0 0.0
    %695 = vmatpush1.msra.mxu0 0.0
    %696 = vmatprep.subr.mxu0 0.0
    %697 = vmatpush1.msra.mxu0 0.0
    %698 = vmatprep.subr.mxu0 0.0
    %699 = vmatpush1.msra.mxu0 0.0
    %700 = vmatprep.subr.mxu0 0.0
    %701 = vmatpush1.msra.mxu0 0.0
    %702 = vmatprep.subr.mxu0 0.0
    %703 = vmatpush1.msra.mxu0 0.0
    %704 = vmatprep.subr.mxu0 0.0
    %705 = vmatpush1.msra.mxu0 0.0
    %706 = vmatprep.subr.mxu0 0.0
    %707 = vmatpush1.msra.mxu0 0.0
    %708 = vmatprep.subr.mxu0 0.0
    %709 = vmatpush1.msra.mxu0 0.0
    %710 = vmatprep.subr.mxu0 0.0
    %711 = vmatpush1.msra.mxu0 0.0
    %712 = vmatprep.subr.mxu0 0.0
    %713 = vmatpush1.msra.mxu0 0.0
    %714 = vmatprep.subr.mxu0 0.0
    %715 = vmatpush1.msra.mxu0 0.0
    %716 = vmatprep.subr.mxu0 0.0
    %717 = vmatpush1.msra.mxu0 0.0
    %718 = vmatprep.subr.mxu0 0.0
    %719 = vmatpush1.msra.mxu0 0.0
    %720 = vmatprep.subr.mxu0 0.0
    %721 = vmatpush1.msra.mxu0 0.0
    %722 = vmatprep.subr.mxu0 0.0
    %723 = vmatpush1.msra.mxu0 0.0
    %724 = vmatprep.subr.mxu0 0.0
    %725 = vmatpush1.msra.mxu0 0.0
    %726 = vmatprep.subr.mxu0 0.0
    %727 = vmatpush1.msra.mxu0 0.0
    %728 = vmatprep.subr.mxu0 0.0
    %729 = vmatpush1.msra.mxu0 0.0
    %730 = vmatprep.subr.mxu0 0.0
    %731 = vmatpush1.msra.mxu0 0.0
    %732 = vmatprep.subr.mxu0 0.0
    %733 = vmatpush1.msra.mxu0 0.0
    %734 = vmatprep.subr.mxu0 0.0
    %735 = vmatpush1.msra.mxu0 0.0
    %736 = vmatprep.subr.mxu0 0.0
    %737 = vmatpush1.msra.mxu0 0.0
    %738 = vmatprep.mubr.f32.mxu0 0.0
    %739 = vmatmul.mubr.f32.gmra.mrb[0].mxu0 %v672
    %v740 = vpop.f32.mrb[0].mxu0
    %v741 = vadd.f32 0.0, %v740
    %v742 = vpop.f32.mrb[0].mxu0
    %743 = vdwg.mxu0
    %v744 = vadd.f32 %v341, %v741
    %v745 = vtanh.pop %v744
    %v747 = vsel %vm77, %v745, 0
    %749 = vmatprep.subr.mxu0 0.0
    %750 = vmatpush1.msra.mxu0 %v360
    %751 = vmatprep.subr.mxu0 0.0
    %752 = vmatpush1.msra.mxu0 %v362
    %753 = vmatprep.subr.mxu0 0.0
    %754 = vmatpush1.msra.mxu0 %v364
    %755 = vmatprep.subr.mxu0 0.0
    %756 = vmatpush1.msra.mxu0 %v366
    %757 = vmatprep.subr.mxu0 0.0
    %758 = vmatpush1.msra.mxu0 0.0
    %759 = vmatprep.subr.mxu0 0.0
    %760 = vmatpush1.msra.mxu0 0.0
    %761 = vmatprep.subr.mxu0 0.0
    %762 = vmatpush1.msra.mxu0 0.0
    %763 = vmatprep.subr.mxu0 0.0
    %764 = vmatpush1.msra.mxu0 0.0
    %765 = vmatprep.subr.mxu0 0.0
    %766 = vmatpush1.msra.mxu0 0.0
    %767 = vmatprep.subr.mxu0 0.0
    %768 = vmatpush1.msra.mxu0 0.0
    %769 = vmatprep.subr.mxu0 0.0
    %770 = vmatpush1.msra.mxu0 0.0
    %771 = vmatprep.subr.mxu0 0.0
    %772 = vmatpush1.msra.mxu0 0.0
    %773 = vmatprep.subr.mxu0 0.0
    %774 = vmatpush1.msra.mxu0 0.0
    %775 = vmatprep.subr.mxu0 0.0
    %776 = vmatpush1.msra.mxu0 0.0
    %777 = vmatprep.subr.mxu0 0.0
    %778 = vmatpush1.msra.mxu0 0.0
    %779 = vmatprep.subr.mxu0 0.0
    %780 = vmatpush1.msra.mxu0 0.0
    %781 = vmatprep.subr.mxu0 0.0
    %782 = vmatpush1.msra.mxu0 0.0
    %783 = vmatprep.subr.mxu0 0.0
    %784 = vmatpush1.msra.mxu0 0.0
    %785 = vmatprep.subr.mxu0 0.0
    %786 = vmatpush1.msra.mxu0 0.0
    %787 = vmatprep.subr.mxu0 0.0
    %788 = vmatpush1.msra.mxu0 0.0
    %789 = vmatprep.subr.mxu0 0.0
    %790 = vmatpush1.msra.mxu0 0.0
    %791 = vmatprep.subr.mxu0 0.0
    %792 = vmatpush1.msra.mxu0 0.0
    %793 = vmatprep.subr.mxu0 0.0
    %794 = vmatpush1.msra.mxu0 0.0
    %795 = vmatprep.subr.mxu0 0.0
    %796 = vmatpush1.msra.mxu0 0.0
    %797 = vmatprep.subr.mxu0 0.0
    %798 = vmatpush1.msra.mxu0 0.0
    %799 = vmatprep.subr.mxu0 0.0
    %800 = vmatpush1.msra.mxu0 0.0
    %801 = vmatprep.subr.mxu0 0.0
    %802 = vmatpush1.msra.mxu0 0.0
    %803 = vmatprep.subr.mxu0 0.0
    %804 = vmatpush1.msra.mxu0 0.0
    %805 = vmatprep.subr.mxu0 0.0
    %806 = vmatpush1.msra.mxu0 0.0
    %807 = vmatprep.subr.mxu0 0.0
    %808 = vmatpush1.msra.mxu0 0.0
    %809 = vmatprep.subr.mxu0 0.0
    %810 = vmatpush1.msra.mxu0 0.0
    %811 = vmatprep.subr.mxu0 0.0
    %812 = vmatpush1.msra.mxu0 0.0
    %813 = vmatprep.mubr.f32.mxu0 0.0
    %814 = vmatmul.mubr.f32.gmra.mrb[0].mxu0 %v747
    %v815 = vpop.f32.mrb[0].mxu0
    %v816 = vadd.f32 0.0, %v815
    %v817 = vpop.f32.mrb[0].mxu0
    %818 = vdwg.mxu0
    %v819 = vadd.f32 %v346, %v816
    %v820 = vtanh.pop %v819
    %v822 = vsel %vm77, %v820, 0
    %824 = vmatprep.subr.mxu0 0.0
    %825 = vmatpush1.msra.mxu0 %v360
    %826 = vmatprep.subr.mxu0 0.0
    %827 = vmatpush1.msra.mxu0 %v362
    %828 = vmatprep.subr.mxu0 0.0
    %829 = vmatpush1.msra.mxu0 %v364
    %830 = vmatprep.subr.mxu0 0.0
    %831 = vmatpush1.msra.mxu0 %v366
    %832 = vmatprep.subr.mxu0 0.0
    %833 = vmatpush1.msra.mxu0 0.0
    %834 = vmatprep.subr.mxu0 0.0
    %835 = vmatpush1.msra.mxu0 0.0
    %836 = vmatprep.subr.mxu0 0.0
    %837 = vmatpush1.msra.mxu0 0.0
    %838 = vmatprep.subr.mxu0 0.0
    %839 = vmatpush1.msra.mxu0 0.0
    %840 = vmatprep.subr.mxu0 0.0
    %841 = vmatpush1.msra.mxu0 0.0
    %842 = vmatprep.subr.mxu0 0.0
    %843 = vmatpush1.msra.mxu0 0.0
    %844 = vmatprep.subr.mxu0 0.0
    %845 = vmatpush1.msra.mxu0 0.0
    %846 = vmatprep.subr.mxu0 0.0
    %847 = vmatpush1.msra.mxu0 0.0
    %848 = vmatprep.subr.mxu0 0.0
    %849 = vmatpush1.msra.mxu0 0.0
    %850 = vmatprep.subr.mxu0 0.0
    %851 = vmatpush1.msra.mxu0 0.0
    %852 = vmatprep.subr.mxu0 0.0
    %853 = vmatpush1.msra.mxu0 0.0
    %854 = vmatprep.subr.mxu0 0.0
    %855 = vmatpush1.msra.mxu0 0.0
    %856 = vmatprep.subr.mxu0 0.0
    %857 = vmatpush1.msra.mxu0 0.0
    %858 = vmatprep.subr.mxu0 0.0
    %859 = vmatpush1.msra.mxu0 0.0
    %860 = vmatprep.subr.mxu0 0.0
    %861 = vmatpush1.msra.mxu0 0.0
    %862 = vmatprep.subr.mxu0 0.0
    %863 = vmatpush1.msra.mxu0 0.0
    %864 = vmatprep.subr.mxu0 0.0
    %865 = vmatpush1.msra.mxu0 0.0
    %866 = vmatprep.subr.mxu0 0.0
    %867 = vmatpush1.msra.mxu0 0.0
    %868 = vmatprep.subr.mxu0 0.0
    %869 = vmatpush1.msra.mxu0 0.0
    %870 = vmatprep.subr.mxu0 0.0
    %871 = vmatpush1.msra.mxu0 0.0
    %872 = vmatprep.subr.mxu0 0.0
    %873 = vmatpush1.msra.mxu0 0.0
    %874 = vmatprep.subr.mxu0 0.0
    %875 = vmatpush1.msra.mxu0 0.0
    %876 = vmatprep.subr.mxu0 0.0
    %877 = vmatpush1.msra.mxu0 0.0
    %878 = vmatprep.subr.mxu0 0.0
    %879 = vmatpush1.msra.mxu0 0.0
    %880 = vmatprep.subr.mxu0 0.0
    %881 = vmatpush1.msra.mxu0 0.0
    %882 = vmatprep.subr.mxu0 0.0
    %883 = vmatpush1.msra.mxu0 0.0
    %884 = vmatprep.subr.mxu0 0.0
    %885 = vmatpush1.msra.mxu0 0.0
    %886 = vmatprep.subr.mxu0 0.0
    %887 = vmatpush1.msra.mxu0 0.0
    %888 = vmatprep.mubr.f32.mxu0 0.0
    %889 = vmatmul.mubr.f32.gmra.mrb[0].mxu0 %v822
    %v890 = vpop.f32.mrb[0].mxu0
    %v891 = vadd.f32 0.0, %v890
    %v892 = vpop.f32.mrb[0].mxu0
    %893 = vdwg.mxu0
    %v894 = vadd.f32 %v351, %v891
    %v895 = vtanh.pop %v894
    %v897 = vsel %vm77, %v895, 0
    %899 = vmatprep.subr.mxu0 0.0
    %900 = vmatpush1.msra.mxu0 %v360
    %901 = vmatprep.subr.mxu0 0.0
    %902 = vmatpush1.msra.mxu0 %v362
    %903 = vmatprep.subr.mxu0 0.0
    %904 = vmatpush1.msra.mxu0 %v364
    %905 = vmatprep.subr.mxu0 0.0
    %906 = vmatpush1.msra.mxu0 %v366
    %907 = vmatprep.subr.mxu0 0.0
    %908 = vmatpush1.msra.mxu0 0.0
    %909 = vmatprep.subr.mxu0 0.0
    %910 = vmatpush1.msra.mxu0 0.0
    %911 = vmatprep.subr.mxu0 0.0
    %912 = vmatpush1.msra.mxu0 0.0
    %913 = vmatprep.subr.mxu0 0.0
    %914 = vmatpush1.msra.mxu0 0.0
    %915 = vmatprep.subr.mxu0 0.0
    %916 = vmatpush1.msra.mxu0 0.0
    %917 = vmatprep.subr.mxu0 0.0
    %918 = vmatpush1.msra.mxu0 0.0
    %919 = vmatprep.subr.mxu0 0.0
    %920 = vmatpush1.msra.mxu0 0.0
    %921 = vmatprep.subr.mxu0 0.0
    %922 = vmatpush1.msra.mxu0 0.0
    %923 = vmatprep.subr.mxu0 0.0
    %924 = vmatpush1.msra.mxu0 0.0
    %925 = vmatprep.subr.mxu0 0.0
    %926 = vmatpush1.msra.mxu0 0.0
    %927 = vmatprep.subr.mxu0 0.0
    %928 = vmatpush1.msra.mxu0 0.0
    %929 = vmatprep.subr.mxu0 0.0
    %930 = vmatpush1.msra.mxu0 0.0
    %931 = vmatprep.subr.mxu0 0.0
    %932 = vmatpush1.msra.mxu0 0.0
    %933 = vmatprep.subr.mxu0 0.0
    %934 = vmatpush1.msra.mxu0 0.0
    %935 = vmatprep.subr.mxu0 0.0
    %936 = vmatpush1.msra.mxu0 0.0
    %937 = vmatprep.subr.mxu0 0.0
    %938 = vmatpush1.msra.mxu0 0.0
    %939 = vmatprep.subr.mxu0 0.0
    %940 = vmatpush1.msra.mxu0 0.0
    %941 = vmatprep.subr.mxu0 0.0
    %942 = vmatpush1.msra.mxu0 0.0
    %943 = vmatprep.subr.mxu0 0.0
    %944 = vmatpush1.msra.mxu0 0.0
    %945 = vmatprep.subr.mxu0 0.0
    %946 = vmatpush1.msra.mxu0 0.0
    %947 = vmatprep.subr.mxu0 0.0
    %948 = vmatpush1.msra.mxu0 0.0
    %949 = vmatprep.subr.mxu0 0.0
    %950 = vmatpush1.msra.mxu0 0.0
    %951 = vmatprep.subr.mxu0 0.0
    %952 = vmatpush1.msra.mxu0 0.0
    %953 = vmatprep.subr.mxu0 0.0
    %954 = vmatpush1.msra.mxu0 0.0
    %955 = vmatprep.subr.mxu0 0.0
    %956 = vmatpush1.msra.mxu0 0.0
    %957 = vmatprep.subr.mxu0 0.0
    %958 = vmatpush1.msra.mxu0 0.0
    %959 = vmatprep.subr.mxu0 0.0
    %960 = vmatpush1.msra.mxu0 0.0
    %961 = vmatprep.subr.mxu0 0.0
    %962 = vmatpush1.msra.mxu0 0.0
    %963 = vmatprep.mubr.f32.mxu0 0.0
    %964 = vmatmul.mubr.f32.gmra.mrb[0].mxu0 %v897
    %v965 = vpop.f32.mrb[0].mxu0
    %v966 = vadd.f32 0.0, %v965
    %v967 = vpop.f32.mrb[0].mxu0
    %968 = vdwg.mxu0
    %v969 = vadd.f32 %v356, %v966
    %v970 = vtanh.pop %v969
    %971 = vrot.lane.b32.xlu0 %v73, 32
    %v972 = vpop.permute.xlu0 %971
    %973 = vrot.lane.b32.xlu0 %v74, 32
    %v974 = vpop.permute.xlu0 %973
    %975 = vrot.lane.b32.xlu0 %v75, 32
    %v976 = vpop.permute.xlu0 %975
    %977 = vrot.lane.b32.xlu0 %v76, 32
    %v978 = vpop.permute.xlu0 %977
    %983 = vrot.lane.b32.xlu0 %v212, 96
    %v984 = vpop.permute.xlu0 %983
    %v987 = vsel %vm77, %v970, 0
    %989 = vmatprep.subr.mxu0 0.0
    %990 = vmatpush1.msra.mxu0 %v972
    %991 = vmatprep.subr.mxu0 0.0
    %992 = vmatpush1.msra.mxu0 %v974
    %993 = vmatprep.subr.mxu0 0.0
    %994 = vmatpush1.msra.mxu0 %v976
    %995 = vmatprep.subr.mxu0 0.0
    %996 = vmatpush1.msra.mxu0 %v978
    %997 = vmatprep.subr.mxu0 0.0
    %998 = vmatpush1.msra.mxu0 0.0
    %999 = vmatprep.subr.mxu0 0.0
    %1000 = vmatpush1.msra.mxu0 0.0
    %1001 = vmatprep.subr.mxu0 0.0
    %1002 = vmatpush1.msra.mxu0 0.0
    %1003 = vmatprep.subr.mxu0 0.0
    %1004 = vmatpush1.msra.mxu0 0.0
    %1005 = vmatprep.subr.mxu0 0.0
    %1006 = vmatpush1.msra.mxu0 0.0
    %1007 = vmatprep.subr.mxu0 0.0
    %1008 = vmatpush1.msra.mxu0 0.0
    %1009 = vmatprep.subr.mxu0 0.0
    %1010 = vmatpush1.msra.mxu0 0.0
    %1011 = vmatprep.subr.mxu0 0.0
    %1012 = vmatpush1.msra.mxu0 0.0
    %1013 = vmatprep.subr.mxu0 0.0
    %1014 = vmatpush1.msra.mxu0 0.0
    %1015 = vmatprep.subr.mxu0 0.0
    %1016 = vmatpush1.msra.mxu0 0.0
    %1017 = vmatprep.subr.mxu0 0.0
    %1018 = vmatpush1.msra.mxu0 0.0
    %1019 = vmatprep.subr.mxu0 0.0
    %1020 = vmatpush1.msra.mxu0 0.0
    %1021 = vmatprep.subr.mxu0 0.0
    %1022 = vmatpush1.msra.mxu0 0.0
    %1023 = vmatprep.subr.mxu0 0.0
    %1024 = vmatpush1.msra.mxu0 0.0
    %1025 = vmatprep.subr.mxu0 0.0
    %1026 = vmatpush1.msra.mxu0 0.0
    %1027 = vmatprep.subr.mxu0 0.0
    %1028 = vmatpush1.msra.mxu0 0.0
    %1029 = vmatprep.subr.mxu0 0.0
    %1030 = vmatpush1.msra.mxu0 0.0
    %1031 = vmatprep.subr.mxu0 0.0
    %1032 = vmatpush1.msra.mxu0 0.0
    %1033 = vmatprep.subr.mxu0 0.0
    %1034 = vmatpush1.msra.mxu0 0.0
    %1035 = vmatprep.subr.mxu0 0.0
    %1036 = vmatpush1.msra.mxu0 0.0
    %1037 = vmatprep.subr.mxu0 0.0
    %1038 = vmatpush1.msra.mxu0 0.0
    %1039 = vmatprep.subr.mxu0 0.0
    %1040 = vmatpush1.msra.mxu0 0.0
    %1041 = vmatprep.subr.mxu0 0.0
    %1042 = vmatpush1.msra.mxu0 0.0
    %1043 = vmatprep.subr.mxu0 0.0
    %1044 = vmatpush1.msra.mxu0 0.0
    %1045 = vmatprep.subr.mxu0 0.0
    %1046 = vmatpush1.msra.mxu0 0.0
    %1047 = vmatprep.subr.mxu0 0.0
    %1048 = vmatpush1.msra.mxu0 0.0
    %1049 = vmatprep.subr.mxu0 0.0
    %1050 = vmatpush1.msra.mxu0 0.0
    %1051 = vmatprep.subr.mxu0 0.0
    %1052 = vmatpush1.msra.mxu0 0.0
    %1053 = vmatprep.mubr.f32.mxu0 0.0
    %1054 = vmatmul.mubr.f32.gmra.mrb[0].mxu0 %v447
    %v1055 = vpop.f32.mrb[0].mxu0
    %v1056 = vadd.f32 %v984, %v1055
    %v1057 = vpop.f32.mrb[0].mxu0
    %1058 = vmatprep.mubr.f32.mxu0 0.0
    %1059 = vmatmul.mubr.f32.gmra.mrb[0].mxu0 %v522
    %v1060 = vpop.f32.mrb[0].mxu0
    %v1061 = vadd.f32 %v984, %v1060
    %v1062 = vpop.f32.mrb[0].mxu0
    %1063 = vmatprep.mubr.f32.mxu0 0.0
    %1064 = vmatmul.mubr.f32.gmra.mrb[0].mxu0 %v597
    %v1065 = vpop.f32.mrb[0].mxu0
    %v1066 = vadd.f32 %v984, %v1065
    %v1067 = vpop.f32.mrb[0].mxu0
    %1068 = vmatprep.mubr.f32.mxu0 0.0
    %1069 = vmatmul.mubr.f32.gmra.mrb[0].mxu0 %v672
    %v1070 = vpop.f32.mrb[0].mxu0
    %v1071 = vadd.f32 %v984, %v1070
    %v1072 = vpop.f32.mrb[0].mxu0
    %1073 = vmatprep.mubr.f32.mxu0 0.0
    %1074 = vmatmul.mubr.f32.gmra.mrb[0].mxu0 %v747
    %v1075 = vpop.f32.mrb[0].mxu0
    %v1076 = vadd.f32 %v984, %v1075
    %v1077 = vpop.f32.mrb[0].mxu0
    %1078 = vmatprep.mubr.f32.mxu0 0.0
    %1079 = vmatmul.mubr.f32.gmra.mrb[0].mxu0 %v822
    %v1080 = vpop.f32.mrb[0].mxu0
    %v1081 = vadd.f32 %v984, %v1080
    %v1082 = vpop.f32.mrb[0].mxu0
    %1083 = vmatprep.mubr.f32.mxu0 0.0
    %1084 = vmatmul.mubr.f32.gmra.mrb[0].mxu0 %v897
    %v1085 = vpop.f32.mrb[0].mxu0
    %v1086 = vadd.f32 %v984, %v1085
    %v1087 = vpop.f32.mrb[0].mxu0
    %1088 = vmatprep.mubr.f32.mxu0 0.0
    %1089 = vmatmul.mubr.f32.gmra.mrb[0].mxu0 %v987
    %v1090 = vpop.f32.mrb[0].mxu0
    %v1091 = vadd.f32 %v984, %v1090
    %v1092 = vpop.f32.mrb[0].mxu0
    %1093 = vdwg.mxu0
    %v1094 = vtanh.pop %v1056
    %v1095 = vtanh.pop %v1061
    %v1096 = vtanh.pop %v1066
    %v1097 = vtanh.pop %v1071
    %v1098 = vtanh.pop %v1076
    %v1099 = vtanh.pop %v1081
    %v1100 = vtanh.pop %v1086
    %v1101 = vtanh.pop %v1091
    %v1102 = vld [vmem:[%s1 + $0x8] sm:$0xff]
    %v1103 = vld [vmem:[%s1 + $0x18] sm:$0xff]
    %v1104 = vld [vmem:[%s1 + $0x28] sm:$0xff]
    %v1105 = vld [vmem:[%s1 + $0x38] sm:$0xff]
    %v1106 = vld [vmem:[%s2] sm:$0x3]
    %v1108 = vlaneseq
    %v1109 = vshrl.u32 %v1108, 7
    %v1110 = vsub.s32 0, %v1109
    %v1111 = vrot.slane %v1106, %v1110
    %v1112 = vlaneseq
    %v1113 = vshrl.u32 %v1112, 7
    %v1114 = vsub.s32 1, %v1113
    %v1115 = vrot.slane %v1106, %v1114
    %1116 = vrot.lane.b32.xlu0 %v1111, 64
    %v1117 = vpop.permute.xlu0 %1116
    %1118 = vrot.lane.b32.xlu0 %v1115, 64
    %v1119 = vpop.permute.xlu0 %1118
    %vm1120 = vcmask 523264
    %v1121 = vsel %vm1120, %v1117, %v1119
    %v1124 = vsel %vm77, %v1094, 0
    %v1127 = vsel %vm77, %v1095, 0
    %v1130 = vsel %vm77, %v1096, 0
    %v1133 = vsel %vm77, %v1097, 0
    %v1136 = vsel %vm77, %v1098, 0
    %v1139 = vsel %vm77, %v1099, 0
    %v1142 = vsel %vm77, %v1100, 0
    %v1145 = vsel %vm77, %v1101, 0
    %1147 = vmatprep.subr.mxu0 0.0
    %1148 = vmatpush1.msra.mxu0 %v1102
    %1149 = vmatprep.subr.mxu0 0.0
    %1150 = vmatpush1.msra.mxu0 %v1103
    %1151 = vmatprep.subr.mxu0 0.0
    %1152 = vmatpush1.msra.mxu0 %v1104
    %1153 = vmatprep.subr.mxu0 0.0
    %1154 = vmatpush1.msra.mxu0 %v1105
    %1155 = vmatprep.subr.mxu0 0.0
    %1156 = vmatpush1.msra.mxu0 0.0
    %1157 = vmatprep.subr.mxu0 0.0
    %1158 = vmatpush1.msra.mxu0 0.0
    %1159 = vmatprep.subr.mxu0 0.0
    %1160 = vmatpush1.msra.mxu0 0.0
    %1161 = vmatprep.subr.mxu0 0.0
    %1162 = vmatpush1.msra.mxu0 0.0
    %1163 = vmatprep.subr.mxu0 0.0
    %1164 = vmatpush1.msra.mxu0 0.0
    %1165 = vmatprep.subr.mxu0 0.0
    %1166 = vmatpush1.msra.mxu0 0.0
    %1167 = vmatprep.subr.mxu0 0.0
    %1168 = vmatpush1.msra.mxu0 0.0
    %1169 = vmatprep.subr.mxu0 0.0
    %1170 = vmatpush1.msra.mxu0 0.0
    %1171 = vmatprep.subr.mxu0 0.0
    %1172 = vmatpush1.msra.mxu0 0.0
    %1173 = vmatprep.subr.mxu0 0.0
    %1174 = vmatpush1.msra.mxu0 0.0
    %1175 = vmatprep.subr.mxu0 0.0
    %1176 = vmatpush1.msra.mxu0 0.0
    %1177 = vmatprep.subr.mxu0 0.0
    %1178 = vmatpush1.msra.mxu0 0.0
    %1179 = vmatprep.subr.mxu0 0.0
    %1180 = vmatpush1.msra.mxu0 0.0
    %1181 = vmatprep.subr.mxu0 0.0
    %1182 = vmatpush1.msra.mxu0 0.0
    %1183 = vmatprep.subr.mxu0 0.0
    %1184 = vmatpush1.msra.mxu0 0.0
    %1185 = vmatprep.subr.mxu0 0.0
    %1186 = vmatpush1.msra.mxu0 0.0
    %1187 = vmatprep.subr.mxu0 0.0
    %1188 = vmatpush1.msra.mxu0 0.0
    %1189 = vmatprep.subr.mxu0 0.0
    %1190 = vmatpush1.msra.mxu0 0.0
    %1191 = vmatprep.subr.mxu0 0.0
    %1192 = vmatpush1.msra.mxu0 0.0
    %1193 = vmatprep.subr.mxu0 0.0
    %1194 = vmatpush1.msra.mxu0 0.0
    %1195 = vmatprep.subr.mxu0 0.0
    %1196 = vmatpush1.msra.mxu0 0.0
    %1197 = vmatprep.subr.mxu0 0.0
    %1198 = vmatpush1.msra.mxu0 0.0
    %1199 = vmatprep.subr.mxu0 0.0
    %1200 = vmatpush1.msra.mxu0 0.0
    %1201 = vmatprep.subr.mxu0 0.0
    %1202 = vmatpush1.msra.mxu0 0.0
    %1203 = vmatprep.subr.mxu0 0.0
    %1204 = vmatpush1.msra.mxu0 0.0
    %1205 = vmatprep.subr.mxu0 0.0
    %1206 = vmatpush1.msra.mxu0 0.0
    %1207 = vmatprep.subr.mxu0 0.0
    %1208 = vmatpush1.msra.mxu0 0.0
    %1209 = vmatprep.subr.mxu0 0.0
    %1210 = vmatpush1.msra.mxu0 0.0
    %1211 = vmatprep.mubr.f32.mxu0 0.0
    %1212 = vmatmul.mubr.f32.gmra.mrb[0].mxu0 %v1124
    %v1213 = vpop.f32.mrb[0].mxu0
    %v1214 = vadd.f32 %v1121, %v1213
    %v1215 = vpop.f32.mrb[0].mxu0
    %1216 = vmatprep.mubr.f32.mxu0 0.0
    %1217 = vmatmul.mubr.f32.gmra.mrb[0].mxu0 %v1127
    %v1218 = vpop.f32.mrb[0].mxu0
    %v1219 = vadd.f32 %v1121, %v1218
    %v1220 = vpop.f32.mrb[0].mxu0
    %1221 = vmatprep.mubr.f32.mxu0 0.0
    %1222 = vmatmul.mubr.f32.gmra.mrb[0].mxu0 %v1130
    %v1223 = vpop.f32.mrb[0].mxu0
    %v1224 = vadd.f32 %v1121, %v1223
    %v1225 = vpop.f32.mrb[0].mxu0
    %1226 = vmatprep.mubr.f32.mxu0 0.0
    %1227 = vmatmul.mubr.f32.gmra.mrb[0].mxu0 %v1133
    %v1228 = vpop.f32.mrb[0].mxu0
    %v1229 = vadd.f32 %v1121, %v1228
    %v1230 = vpop.f32.mrb[0].mxu0
    %1231 = vmatprep.mubr.f32.mxu0 0.0
    %1232 = vmatmul.mubr.f32.gmra.mrb[0].mxu0 %v1136
    %v1233 = vpop.f32.mrb[0].mxu0
    %v1234 = vadd.f32 %v1121, %v1233
    %v1235 = vpop.f32.mrb[0].mxu0
    %1236 = vmatprep.mubr.f32.mxu0 0.0
    %1237 = vmatmul.mubr.f32.gmra.mrb[0].mxu0 %v1139
    %v1238 = vpop.f32.mrb[0].mxu0
    %v1239 = vadd.f32 %v1121, %v1238
    %v1240 = vpop.f32.mrb[0].mxu0
    %1241 = vmatprep.mubr.f32.mxu0 0.0
    %1242 = vmatmul.mubr.f32.gmra.mrb[0].mxu0 %v1142
    %v1243 = vpop.f32.mrb[0].mxu0
    %v1244 = vadd.f32 %v1121, %v1243
    %v1245 = vpop.f32.mrb[0].mxu0
    %1246 = vmatprep.mubr.f32.mxu0 0.0
    %1247 = vmatmul.mubr.f32.gmra.mrb[0].mxu0 %v1145
    %v1248 = vpop.f32.mrb[0].mxu0
    %v1249 = vadd.f32 %v1121, %v1248
    %v1250 = vpop.f32.mrb[0].mxu0
    %1251 = vdwg.mxu0
    %1252 = vst [vmem:[#allocation2] sm:$0xff] %v1214
    %1253 = vst [vmem:[#allocation2 + $0x8] sm:$0xff] %v1219
    %1254 = vst [vmem:[#allocation2 + $0x10] sm:$0xff] %v1224
    %1255 = vst [vmem:[#allocation2 + $0x18] sm:$0xff] %v1229
    %1256 = vst [vmem:[#allocation2 + $0x20] sm:$0xff] %v1234
    %1257 = vst [vmem:[#allocation2 + $0x28] sm:$0xff] %v1239
    %1258 = vst [vmem:[#allocation2 + $0x30] sm:$0xff] %v1244
    %1259 = vst [vmem:[#allocation2 + $0x38] sm:$0xff] %v1249
    // Predicated region
    $region14: #{tpu_custom_call.1} parent=1 // pred_check
      _
    $region15: #{tpu_custom_call.1} parent=1 // pred_check_branch
      %1261 = sbr.rel (0) target = $region17
    $region16: #{tpu_custom_call.1} parent=1 // pred_region
      %s1263 = ssub.s32 1024, 1024
      %1264 = vsyncadd [#allocation3], %s1263
      %s1265 = sshll.u32 [#allocation2], 4
      %s1266 = int_to_ptr.vmem [resolvable:$true] %s1265
      %1271 = dma.vmem_to_hbm [thread:$0]  %s1266, 1024, %s3, [#allocation3], 128, 128, 8
    $region17: #{tpu_custom_call.1} parent=1 // pred_fallthru
      _
    // Predicated region
    $region18: #{tpu_custom_call.1} parent=1 // pred_check
      _
    $region19: #{tpu_custom_call.1} parent=1 // pred_check_branch
      %1273 = sbr.rel (0) target = $region21
    $region20: #{tpu_custom_call.1} parent=1 // pred_region
      %1274 = dma.done [#allocation3], 1024
    $region21: #{tpu_custom_call.1} parent=1 // pred_fallthru
      _
    %1275 = vsyncpa [#allocation3], 1

</llo_original>
